<compile_context>
chip_gen: v7x
topology: tpu7x:2x2x1
jax: 0.10.0
libtpu: 0.0.40
codegen_flags: <defaults>
</compile_context>

<pallas_src>
import functools

import jax
import jax.numpy as jnp
import numpy as np
from jax.experimental import pallas as pl
from jax.experimental.pallas import tpu as pltpu

_BLOCK_BYTES = 4 * 1024 * 1024    # per-block budget (good for v5e/v6e/v7x)
_VMEM_LIMIT = 40 * 1024 * 1024    # explicit scoped-VMEM limit; < 64 MiB (v7x
                                  # physical), covers 2x(in+out) 4 MiB blocks.


def _sublane(itemsize):
    # Sublane packing granularity: 8 rows for 32-bit, 16 for bf16, 32 for 8-bit.
    return max(8, 32 // itemsize)


def _choose_block(rows, cols, itemsize):
    """Pick (block_rows, block_cols): lane-dense first, then fill the budget."""
    sub = _sublane(itemsize)
    # Lane dim: as wide as the budget allows with a single sublane group.
    max_cols = max(128, (_BLOCK_BYTES // (sub * itemsize)) // 128 * 128)
    bc = cols if cols <= max_cols else max_cols
    # Sublane dim: grow rows to fill the remaining budget (no fixed row cap).
    lane_cols = max(bc, 128)      # narrow arrays still occupy full 128-lane vregs
    max_rows = max(sub, (_BLOCK_BYTES // (lane_cols * itemsize)) // sub * sub)
    br = rows if rows <= max_rows else max_rows
    return br, bc


def _mean_shift_kernel(x_ref, b_ref, o_ref, *, block_rows, single_row_block):
    # x_ref: (br, bc)  b_ref: (R_pad, 1) resident bias column  o_ref: (br, bc)
    # The conv weight is the 3x3 identity, so the 1x1 conv reduces to a
    # broadcast add; keep it on the VPU and leave the MXU idle.
    if single_row_block:
        b = b_ref[...]
    else:
        i = pl.program_id(1)                      # row-block index (minor axis)
        start = i * block_rows
        if block_rows % 8 == 0:
            start = pl.multiple_of(start, block_rows)
        b = b_ref[pl.ds(start, block_rows), :]
    o_ref[...] = x_ref[...] + b


def mean_shift(x, bias, *, donate_x=False):
    """MeanShift forward.  x: (N, C, H, W), bias: (C,).  Returns x + bias[c]."""
    N, C, H, W = x.shape
    R, Cols = N * C, H * W

    x2 = x.reshape(R, Cols)            # free reshape of contiguous NCHW
    itemsize = x2.dtype.itemsize

    br, bc = _choose_block(R, Cols, itemsize)
    gc = pl.cdiv(Cols, bc)             # column blocks (the big axis)
    gr = pl.cdiv(R, br)                # row blocks (usually 1 for MeanShift)

    # Per-row bias column (row r -> channel r % C), padded so every in-kernel
    # dynamic slice of the resident bias stays in bounds on the last row block.
    r_pad = gr * br
    bias_rows = jnp.tile(bias.astype(x2.dtype), N).reshape(R, 1)
    if r_pad > R:
        bias_rows = jnp.pad(bias_rows, ((0, r_pad - R), (0, 0)))

    # Column axis leads the grid so the parallel (megacore) split on v7x lands
    # on the axis that actually has many steps.
    grid = (gc, gr)

    nbytes = R * Cols * itemsize
    kernel = functools.partial(
        _mean_shift_kernel, block_rows=br, single_row_block=(gr == 1))

    call_kwargs = {}
    if donate_x:
        # Only useful when the caller actually donates x (e.g. via jit
        # donate_argnums); otherwise XLA would insert a defensive copy.
        call_kwargs["input_output_aliases"] = {0: 0}

    out = pl.pallas_call(
        kernel,
        out_shape=jax.ShapeDtypeStruct((R, Cols), x2.dtype),
        grid=grid,
        in_specs=[
            pl.BlockSpec((br, bc), lambda j, i: (i, j)),        # pixel tile
            pl.BlockSpec((r_pad, 1), lambda j, i: (0, 0)),      # resident bias
        ],
        out_specs=pl.BlockSpec((br, bc), lambda j, i: (i, j)),
        compiler_params=pltpu.CompilerParams(
            dimension_semantics=("parallel", "parallel"),
            vmem_limit_bytes=_VMEM_LIMIT),
        cost_estimate=pl.CostEstimate(
            flops=R * Cols, transcendentals=0,
            bytes_accessed=2 * nbytes + r_pad * itemsize),
        **call_kwargs,
    )(x2, bias_rows)

    return out.reshape(N, C, H, W)     # free reshape back to NCHW


def make_mean_shift_params(mean_rgb, sub):
    """Bias exactly as MeanShift.__init__ builds it (weight is eye(3), so only
    the bias matters for the forward pass)."""
    sign = -1.0 if sub else 1.0
    return sign * jnp.asarray(mean_rgb, dtype=jnp.float32)


if __name__ == "__main__":
    key = jax.random.PRNGKey(0)
    # NCHW input; the conv is fixed at 3 channels.
    N, C, H, W = 2, 3, 16, 16
    x = jax.random.normal(key, (N, C, H, W), dtype=jnp.float32)

    mean_rgb = (0.4488 * 255.0, 0.4371 * 255.0, 0.4040 * 255.0)
    bias = make_mean_shift_params(mean_rgb, sub=True)

    out = jax.block_until_ready(mean_shift(x, bias))

    # Reference: identity 1x1 conv + bias == x + bias broadcast over channels.
    ref = x + bias.reshape(1, C, 1, 1).astype(x.dtype)
    np.testing.assert_allclose(np.asarray(out), np.asarray(ref), rtol=1e-5, atol=1e-5)

    print("KERNEL_OK")
</pallas_src>

<mosaic_0001>
module attributes {stable_mosaic.version = 11 : i64} {
  func.func @_mean_shift_kernel(%arg0: i32, %arg1: i32, %arg2: memref<6x256xf32, #tpu.memory_space<vmem>>, %arg3: memref<6x1xf32, #tpu.memory_space<vmem>>, %arg4: memref<6x256xf32, #tpu.memory_space<vmem>>) attributes {dimension_semantics = [#tpu.dimension_semantics<parallel>, #tpu.dimension_semantics<parallel>], iteration_bounds = array<i64: 1, 1>, scalar_prefetch = 0 : i64, scratch_operands = 0 : i64, tpu.core_type = #tpu.core_type<tc>, window_params = [{transform_indices = @transform_0, window_bounds = array<i64: 6, 256>}, {pipeline_mode = #tpu.pipeline_mode<synchronous>, transform_indices = @transform_1, window_bounds = array<i64: 6, 1>}, {transform_indices = @transform_2, window_bounds = array<i64: 6, 256>}]} {
    %c0 = arith.constant 0 : index
    %c0_0 = arith.constant 0 : index
    %0 = vector.load %arg3[%c0, %c0_0] : memref<6x1xf32, #tpu.memory_space<vmem>>, vector<6x1xf32>
    %c0_1 = arith.constant 0 : index
    %c0_2 = arith.constant 0 : index
    %1 = vector.load %arg2[%c0_1, %c0_2] : memref<6x256xf32, #tpu.memory_space<vmem>>, vector<6x256xf32>
    %2 = vector.broadcast %0 : vector<6x1xf32> to vector<6x256xf32>
    %3 = arith.addf %1, %2 : vector<6x256xf32>
    %c0_3 = arith.constant 0 : index
    %c0_4 = arith.constant 0 : index
    %4 = vector.load %arg4[%c0_3, %c0_4] : memref<6x256xf32, #tpu.memory_space<vmem>>, vector<6x256xf32>
    tpu.vector_store %arg4[%c0_3, %c0_4], %3 {strides = array<i32>} : memref<6x256xf32, #tpu.memory_space<vmem>>, vector<6x256xf32>,
    return
  }
  func.func @transform_0(%arg0: i32, %arg1: i32) -> (i32, i32) {
    %c0_i32 = arith.constant 0 : i32
    return %arg1, %arg0 : i32, i32
  }
  func.func @transform_1(%arg0: i32, %arg1: i32) -> (i32, i32) {
    %c0_i32 = arith.constant 0 : i32
    %c0_i32_0 = arith.constant 0 : i32
    %c0_i32_1 = arith.constant 0 : i32
    return %c0_i32, %c0_i32_0 : i32, i32
  }
  func.func @transform_2(%arg0: i32, %arg1: i32) -> (i32, i32) {
    %c0_i32 = arith.constant 0 : i32
    return %arg1, %arg0 : i32, i32
  }
}

</mosaic_0001>

<llo_original>
// kernel: tpu_custom_call.1
$region0: #{tpu_custom_call.1}
  #allocation0 [shape = 'u32[]', space=smem, size = 0x4, offset = 0x4, fixed_abs, tag = 'smem constant byte address 0x4 - core index']
  #allocation1 [shape = 'u32[144,128]{1,0:T(1,128)}', space=vmem, size = 0x12000, scoped, tag = 'internal scratch']
  %s0 = inlined_call_operand.hbm [shape: f32[6,256], index: 0, kind: input, shape index: {}]
  %s1 = inlined_call_operand.vmem [shape: f32[6,1], index: 1, kind: input, shape index: {}]
  %s2 = inlined_call_operand.hbm [shape: f32[6,256], index: 2, kind: output, shape index: {}]
  %s3 = sld [smem:[#allocation0]]
  $region22: #{tpu_custom_call.1} parent=0
    _
  %s5 = ssub.s32 1, %s3
  %s6 = scalar_select 0, %s5, %s3
  $region1: #{tpu_custom_call.1} parent=0
    #allocation2 [shape = 'u8[8192]{0}', space=vmem, size = 0x2000, scoped, tag = 'input window, operand 0, single buffered']
    #allocation3 [shape = 's32[1]{0}', space=sflag, size = 0x4, scoped, tag = 'scoped memory for tpu_custom_call.1']
    #allocation4 [shape = 's32[1]{0}', space=sflag, size = 0x4, scoped, tag = 'scoped memory for tpu_custom_call.1']
    #allocation5 [shape = 'u8[8192]{0}', space=vmem, size = 0x2000, scoped, tag = 'output window, operand 0, single buffered']
    %7 = vsyncpa [#allocation3], 0
    %8 = vsyncpa [#allocation4], 0
    // Predicated region
    $region2: #{tpu_custom_call.1} parent=1 // pred_check
      _
    $region3: #{tpu_custom_call.1} parent=1 // pred_check_branch
      %10 = sbr.rel (0) target = $region5
    $region4: #{tpu_custom_call.1} parent=1 // pred_region
      %s12 = ssub.s32 256, 256
      %13 = vsyncadd [#allocation3], %s12
      %s15 = sshll.u32 [#allocation2], 4
      %s16 = int_to_ptr.vmem [resolvable:$true] %s15
      %18 = dma.hbm_to_vmem [thread:$0]  %s0, 256, %s16, [#allocation3]
    $region5: #{tpu_custom_call.1} parent=1 // pred_fallthru
      _
    // Predicated region
    $region6: #{tpu_custom_call.1} parent=1 // pred_check
      _
    $region7: #{tpu_custom_call.1} parent=1 // pred_check_branch
      %20 = sbr.rel (0) target = $region9
    $region8: #{tpu_custom_call.1} parent=1 // pred_region
      _
    $region9: #{tpu_custom_call.1} parent=1 // pred_fallthru
      _
    // Predicated region
    $region10: #{tpu_custom_call.1} parent=1 // pred_check
      _
    $region11: #{tpu_custom_call.1} parent=1 // pred_check_branch
      %22 = sbr.rel (0) target = $region13
    $region12: #{tpu_custom_call.1} parent=1 // pred_region
      %23 = dma.done [#allocation3], 256
    $region13: #{tpu_custom_call.1} parent=1 // pred_fallthru
      _
    %v24 = vld [vmem:[%s1] sm:$0x3f]
    %v25 = vld [vmem:[#allocation2] sm:$0x3f]
    %v26 = vld [vmem:[#allocation2 + $0x8] sm:$0x3f]
    %28 = vset.pattern.permute.xlu0 0
    %29 = vperm.xlu0 %28, %v24
    %v30 = vpop.permute.xlu0 %29
    %v32 = vadd.f32 %v25, %v30
    %v33 = vadd.f32 %v26, %v30
    %34 = vst [vmem:[#allocation5] sm:$0x3f] %v32
    %35 = vst [vmem:[#allocation5 + $0x8] sm:$0x3f] %v33
    // Predicated region
    $region14: #{tpu_custom_call.1} parent=1 // pred_check
      _
    $region15: #{tpu_custom_call.1} parent=1 // pred_check_branch
      %37 = sbr.rel (0) target = $region17
    $region16: #{tpu_custom_call.1} parent=1 // pred_region
      %s39 = ssub.s32 256, 256
      %40 = vsyncadd [#allocation4], %s39
      %s42 = sshll.u32 [#allocation5], 4
      %s43 = int_to_ptr.vmem [resolvable:$true] %s42
      %45 = dma.vmem_to_hbm [thread:$0]  %s43, 256, %s2, [#allocation4]
    $region17: #{tpu_custom_call.1} parent=1 // pred_fallthru
      _
    // Predicated region
    $region18: #{tpu_custom_call.1} parent=1 // pred_check
      _
    $region19: #{tpu_custom_call.1} parent=1 // pred_check_branch
      %47 = sbr.rel (0) target = $region21
    $region20: #{tpu_custom_call.1} parent=1 // pred_region
      %48 = dma.done [#allocation4], 256
    $region21: #{tpu_custom_call.1} parent=1 // pred_fallthru
      _
    %49 = vsyncpa [#allocation3], 1
    %50 = vsyncpa [#allocation4], 1

</llo_original>
